<compile_context>
chip_gen: v7x
topology: tpu7x:2x2x1
jax: 0.10.0
libtpu: 0.0.40
codegen_flags: <defaults>
</compile_context>

<pallas_src>
import jax
import jax.numpy as jnp
from jax.experimental import pallas as pl
from jax.experimental.pallas import tpu as pltpu


def _make_cc_kernel(total_hw, tile_hw, lane_width):
    """Builds the fused CC kernel for fixed HW / tile / accumulator lane width."""
    n_chunks = tile_hw // lane_width
    inv_hw = 1.0 / float(total_hw)
    inv_denom = 1.0 / float(max(total_hw - 1, 1))   # unbiased std; guard HW == 1

    def kernel(x_ref,
               w1m_ref, b1m_ref, w2m_ref, b2m_ref,
               w1s_ref, b1s_ref, w2s_ref, b2s_ref,
               out_ref, sum_acc, sumsq_acc):
        k = pl.program_id(1)

        @pl.when(k == 0)
        def _init():
            sum_acc[...] = jnp.zeros_like(sum_acc)
            sumsq_acc[...] = jnp.zeros_like(sumsq_acc)

        # Stream the tile; cast to f32 inside the kernel (input may be bf16).
        x = x_ref[...].astype(jnp.float32)                     # (1, C, tile_hw)

        # Elementwise (VALU) partial sums over 128-lane-wide static chunks.
        # Static slices are free; this avoids any cross-lane traffic per tile.
        ps = x[:, :, 0:lane_width]
        psq = ps * ps
        for i in range(1, n_chunks):
            xc = x[:, :, i * lane_width:(i + 1) * lane_width]
            ps = ps + xc
            psq = psq + xc * xc
        sum_acc[...] += ps
        sumsq_acc[...] += psq

        @pl.when(k == pl.num_programs(1) - 1)
        def _finalize():
            # Single cross-lane reduce (XLU), once per batch row.
            s = jnp.sum(sum_acc[...], axis=2)                  # (1, C)
            sq = jnp.sum(sumsq_acc[...], axis=2)               # (1, C)
            mean = s * inv_hw
            # One-pass unbiased variance, clamped against FP cancellation.
            var = (sq - mean * s) * inv_denom
            std = jnp.sqrt(jnp.maximum(var, 0.0))

            def squeeze_excite(v, w1t, b1, w2t, b2):
                h = jnp.dot(v, w1t, preferred_element_type=jnp.float32) + b1
                h = jnp.maximum(h, 0.0)                        # ReLU
                o = jnp.dot(h, w2t, preferred_element_type=jnp.float32) + b2
                return jax.nn.sigmoid(o)                       # EUP

            ca_mean = squeeze_excite(mean, w1m_ref[...], b1m_ref[...],
                                     w2m_ref[...], b2m_ref[...])
            ca_var = squeeze_excite(std, w1s_ref[...], b1s_ref[...],
                                    w2s_ref[...], b2s_ref[...])
            res = 0.5 * (ca_mean + ca_var)                     # (1, C)
            out_ref[...] = res.reshape(out_ref.shape)

    return kernel


def _pick_hw_tile(hw, c, itemsize):
    """Largest multiple-of-128 divisor of hw within a VMEM streaming budget."""
    if hw % 128 != 0:
        return hw, hw                      # small / ragged HW: single tile
    budget = 8 * 1024 * 1024               # double-buffered x-tile byte budget
    max_t = min(2048, max(128, budget // (2 * c * itemsize)))
    max_t = (max_t // 128) * 128
    cand = max_t
    while cand >= 128:
        if hw % cand == 0:
            return cand, 128
        cand -= 128
    return 128, 128


def cc_forward(x, params):
    """x: (B, C, H, W) NCHW (f32 or bf16).  Returns (B, C, 1, 1) like PyTorch."""
    B, C, H, W = x.shape
    HW = H * W
    x_flat = x.reshape(B, C, HW)            # no dtype upcast on the wire
    (w1m, b1m, w2m, b2m, w1s, b1s, w2s, b2s) = params
    mid = w1m.shape[1]

    itemsize = jnp.dtype(x.dtype).itemsize
    tile_hw, lane = _pick_hw_tile(HW, C, itemsize)
    n_hw = HW // tile_hw

    kernel = _make_cc_kernel(HW, tile_hw, lane)

    x_spec = pl.BlockSpec((1, C, tile_hw), lambda b, k: (b, 0, k))

    def const_spec(shape):
        # Weights/biases stay resident in VMEM across the whole grid.
        return pl.BlockSpec(shape, lambda b, k: (0, 0))

    grid_spec = pltpu.PrefetchScalarGridSpec(
        num_scalar_prefetch=0,
        grid=(B, n_hw),
        in_specs=[
            x_spec,
            const_spec((C, mid)), const_spec((1, mid)),
            const_spec((mid, C)), const_spec((1, C)),
            const_spec((C, mid)), const_spec((1, mid)),
            const_spec((mid, C)), const_spec((1, C)),
        ],
        out_specs=pl.BlockSpec((1, 1, C), lambda b, k: (b, 0, 0)),
        scratch_shapes=[
            pltpu.VMEM((1, C, lane), jnp.float32),   # running sum
            pltpu.VMEM((1, C, lane), jnp.float32),   # running sum of squares
        ],
    )

    weight_bytes = sum(int(p.size) * 4 for p in params)
    cost = pl.CostEstimate(
        flops=int(4 * B * C * HW + 8 * B * C * mid),
        transcendentals=int(3 * B * C),
        bytes_accessed=int(B * C * HW * itemsize + weight_bytes + B * C * 4),
    )

    out = pl.pallas_call(
        kernel,
        out_shape=jax.ShapeDtypeStruct((B, 1, C), jnp.float32),
        grid_spec=grid_spec,
        compiler_params=pltpu.CompilerParams(
            dimension_semantics=("parallel", "arbitrary"),
            vmem_limit_bytes=32 * 1024 * 1024,
        ),
        cost_estimate=cost,
    )(x_flat, w1m, b1m, w2m, b2m, w1s, b1s, w2s, b2s)
    return out.reshape(B, C, 1, 1)


def make_params(key, channel, reduction=16):
    """Synthetic parameters matching nn.Conv2d(..., 1) shapes.

    PyTorch stores conv weights as (out, in, 1, 1); we store them transposed
    as (in, out) so the kernel can do `v @ w` directly on the MXU.
    """
    mid = channel // reduction
    ks = jax.random.split(key, 8)

    def w(k, shape):
        return jax.random.normal(k, shape, dtype=jnp.float32) * 0.1

    w1m = w(ks[0], (channel, mid)); b1m = w(ks[1], (1, mid))
    w2m = w(ks[2], (mid, channel)); b2m = w(ks[3], (1, channel))
    w1s = w(ks[4], (channel, mid)); b1s = w(ks[5], (1, mid))
    w2s = w(ks[6], (mid, channel)); b2s = w(ks[7], (1, channel))
    return (w1m, b1m, w2m, b2m, w1s, b1s, w2s, b2s)


def cc_reference(x, params):
    """Pure-JAX reference mirroring the PyTorch forward, for validation."""
    (w1m, b1m, w2m, b2m, w1s, b1s, w2s, b2s) = params
    B, C, H, W = x.shape
    xf = x.reshape(B, C, H * W).astype(jnp.float32)
    mean = jnp.mean(xf, axis=2)
    std = jnp.std(xf, axis=2, ddof=1)

    def se(v, w1t, b1, w2t, b2):
        h = jnp.maximum(v @ w1t + b1, 0.0)
        return jax.nn.sigmoid(h @ w2t + b2)

    ca_mean = se(mean, w1m, b1m, w2m, b2m)
    ca_var = se(std, w1s, b1s, w2s, b2s)
    return (0.5 * (ca_mean + ca_var)).reshape(B, C, 1, 1)


if __name__ == "__main__":
    B, C, H, W = 2, 32, 16, 16      # channel=32, reduction=16 -> mid=2
    key = jax.random.PRNGKey(0)
    k_x, k_p = jax.random.split(key)
    x = jax.random.normal(k_x, (B, C, H, W), dtype=jnp.float32)
    params = make_params(k_p, C, reduction=16)

    out = jax.block_until_ready(cc_forward(x, params))
    ref = cc_reference(x, params)

    assert out.shape == (B, C, 1, 1)
    err = float(jnp.max(jnp.abs(out - ref)))
    assert jnp.allclose(out, ref, atol=2e-5, rtol=2e-5), f"max abs err {err}"

    print("KERNEL_OK")
</pallas_src>

<mosaic_0001>
module attributes {stable_mosaic.version = 11 : i64} {
  func.func @kernel(%arg0: i32, %arg1: i32, %arg2: memref<1x32x256xf32, #tpu.memory_space<vmem>>, %arg3: memref<32x2xf32, #tpu.memory_space<vmem>>, %arg4: memref<1x2xf32, #tpu.memory_space<vmem>>, %arg5: memref<2x32xf32, #tpu.memory_space<vmem>>, %arg6: memref<1x32xf32, #tpu.memory_space<vmem>>, %arg7: memref<32x2xf32, #tpu.memory_space<vmem>>, %arg8: memref<1x2xf32, #tpu.memory_space<vmem>>, %arg9: memref<2x32xf32, #tpu.memory_space<vmem>>, %arg10: memref<1x32xf32, #tpu.memory_space<vmem>>, %arg11: memref<1x1x32xf32, #tpu.memory_space<vmem>>, %arg12: memref<1x32x128xf32, #tpu.memory_space<vmem>>, %arg13: memref<1x32x128xf32, #tpu.memory_space<vmem>>) attributes {dimension_semantics = [#tpu.dimension_semantics<parallel>, #tpu.dimension_semantics<arbitrary>], iteration_bounds = array<i64: 2, 1>, scalar_prefetch = 0 : i64, scratch_operands = 2 : i64, tpu.core_type = #tpu.core_type<tc>, window_params = [{transform_indices = @transform_0, window_bounds = array<i64: 1, 32, 256>}, {pipeline_mode = #tpu.pipeline_mode<synchronous>, transform_indices = @transform_1, window_bounds = array<i64: 32, 2>}, {pipeline_mode = #tpu.pipeline_mode<synchronous>, transform_indices = @transform_2, window_bounds = array<i64: 1, 2>}, {pipeline_mode = #tpu.pipeline_mode<synchronous>, transform_indices = @transform_3, window_bounds = array<i64: 2, 32>}, {pipeline_mode = #tpu.pipeline_mode<synchronous>, transform_indices = @transform_4, window_bounds = array<i64: 1, 32>}, {pipeline_mode = #tpu.pipeline_mode<synchronous>, transform_indices = @transform_5, window_bounds = array<i64: 32, 2>}, {pipeline_mode = #tpu.pipeline_mode<synchronous>, transform_indices = @transform_6, window_bounds = array<i64: 1, 2>}, {pipeline_mode = #tpu.pipeline_mode<synchronous>, transform_indices = @transform_7, window_bounds = array<i64: 2, 32>}, {pipeline_mode = #tpu.pipeline_mode<synchronous>, transform_indices = @transform_8, window_bounds = array<i64: 1, 32>}, {transform_indices = @transform_9, window_bounds = array<i64: 1, 1, 32>}]} {
    %c0_i32 = arith.constant 0 : i32
    %0 = arith.cmpi eq, %arg1, %c0_i32 : i32
    %1 = arith.extui %0 : i1 to i32
    %c0_i32_0 = arith.constant 0 : i32
    %2 = arith.cmpi ne, %1, %c0_i32_0 : i32
    scf.if %2 {
      %cst = arith.constant 0.000000e+00 : f32
      %19 = vector.broadcast %cst : f32 to vector<1x32x128xf32>
      %c0_17 = arith.constant 0 : index
      %c0_18 = arith.constant 0 : index
      %c0_19 = arith.constant 0 : index
      %20 = vector.load %arg12[%c0_17, %c0_18, %c0_19] : memref<1x32x128xf32, #tpu.memory_space<vmem>>, vector<1x32x128xf32>
      tpu.vector_store %arg12[%c0_17, %c0_18, %c0_19], %19 {strides = array<i32>} : memref<1x32x128xf32, #tpu.memory_space<vmem>>, vector<1x32x128xf32>,
      %cst_20 = arith.constant 0.000000e+00 : f32
      %21 = vector.broadcast %cst_20 : f32 to vector<1x32x128xf32>
      %c0_21 = arith.constant 0 : index
      %c0_22 = arith.constant 0 : index
      %c0_23 = arith.constant 0 : index
      %22 = vector.load %arg13[%c0_21, %c0_22, %c0_23] : memref<1x32x128xf32, #tpu.memory_space<vmem>>, vector<1x32x128xf32>
      tpu.vector_store %arg13[%c0_21, %c0_22, %c0_23], %21 {strides = array<i32>} : memref<1x32x128xf32, #tpu.memory_space<vmem>>, vector<1x32x128xf32>,
    } else {
    }
    %c0 = arith.constant 0 : index
    %c0_1 = arith.constant 0 : index
    %c0_2 = arith.constant 0 : index
    %3 = vector.load %arg2[%c0, %c0_1, %c0_2] : memref<1x32x256xf32, #tpu.memory_space<vmem>>, vector<1x32x256xf32>
    %4 = vector.extract_strided_slice %3 {offsets = [0, 0, 0], sizes = [1, 32, 128], strides = [1, 1, 1]} : vector<1x32x256xf32> to vector<1x32x128xf32>
    %5 = arith.mulf %4, %4 : vector<1x32x128xf32>
    %6 = vector.extract_strided_slice %3 {offsets = [0, 0, 128], sizes = [1, 32, 128], strides = [1, 1, 1]} : vector<1x32x256xf32> to vector<1x32x128xf32>
    %7 = arith.addf %4, %6 : vector<1x32x128xf32>
    %8 = arith.mulf %6, %6 : vector<1x32x128xf32>
    %9 = arith.addf %5, %8 : vector<1x32x128xf32>
    %c0_3 = arith.constant 0 : index
    %c0_4 = arith.constant 0 : index
    %c0_5 = arith.constant 0 : index
    %10 = vector.load %arg12[%c0_3, %c0_4, %c0_5] : memref<1x32x128xf32, #tpu.memory_space<vmem>>, vector<1x32x128xf32>
    %11 = arith.addf %10, %7 : vector<1x32x128xf32>
    %c0_6 = arith.constant 0 : index
    %c0_7 = arith.constant 0 : index
    %c0_8 = arith.constant 0 : index
    %12 = vector.load %arg12[%c0_6, %c0_7, %c0_8] : memref<1x32x128xf32, #tpu.memory_space<vmem>>, vector<1x32x128xf32>
    tpu.vector_store %arg12[%c0_6, %c0_7, %c0_8], %11 {strides = array<i32>} : memref<1x32x128xf32, #tpu.memory_space<vmem>>, vector<1x32x128xf32>,
    %c0_9 = arith.constant 0 : index
    %c0_10 = arith.constant 0 : index
    %c0_11 = arith.constant 0 : index
    %13 = vector.load %arg13[%c0_9, %c0_10, %c0_11] : memref<1x32x128xf32, #tpu.memory_space<vmem>>, vector<1x32x128xf32>
    %14 = arith.addf %13, %9 : vector<1x32x128xf32>
    %c0_12 = arith.constant 0 : index
    %c0_13 = arith.constant 0 : index
    %c0_14 = arith.constant 0 : index
    %15 = vector.load %arg13[%c0_12, %c0_13, %c0_14] : memref<1x32x128xf32, #tpu.memory_space<vmem>>, vector<1x32x128xf32>
    tpu.vector_store %arg13[%c0_12, %c0_13, %c0_14], %14 {strides = array<i32>} : memref<1x32x128xf32, #tpu.memory_space<vmem>>, vector<1x32x128xf32>,
    %c0_i32_15 = arith.constant 0 : i32
    %16 = arith.cmpi eq, %arg1, %c0_i32_15 : i32
    %17 = arith.extui %16 : i1 to i32
    %c0_i32_16 = arith.constant 0 : i32
    %18 = arith.cmpi ne, %17, %c0_i32_16 : i32
    scf.if %18 {
      %c0_17 = arith.constant 0 : index
      %c0_18 = arith.constant 0 : index
      %c0_19 = arith.constant 0 : index
      %19 = vector.load %arg12[%c0_17, %c0_18, %c0_19] : memref<1x32x128xf32, #tpu.memory_space<vmem>>, vector<1x32x128xf32>
      %cst = arith.constant dense<0.000000e+00> : vector<1x32xf32>
      %20 = vector.multi_reduction <add>, %19, %cst [2] : vector<1x32x128xf32> to vector<1x32xf32>
      %c0_20 = arith.constant 0 : index
      %c0_21 = arith.constant 0 : index
      %c0_22 = arith.constant 0 : index
      %21 = vector.load %arg13[%c0_20, %c0_21, %c0_22] : memref<1x32x128xf32, #tpu.memory_space<vmem>>, vector<1x32x128xf32>
      %cst_23 = arith.constant dense<0.000000e+00> : vector<1x32xf32>
      %22 = vector.multi_reduction <add>, %21, %cst_23 [2] : vector<1x32x128xf32> to vector<1x32xf32>
      %cst_24 = arith.constant 3.906250e-03 : f32
      %23 = vector.broadcast %cst_24 : f32 to vector<1x32xf32>
      %24 = arith.mulf %20, %23 : vector<1x32xf32>
      %25 = arith.mulf %24, %20 : vector<1x32xf32>
      %26 = arith.subf %22, %25 : vector<1x32xf32>
      %cst_25 = arith.constant 0.00392156886 : f32
      %27 = vector.broadcast %cst_25 : f32 to vector<1x32xf32>
      %28 = arith.mulf %26, %27 : vector<1x32xf32>
      %cst_26 = arith.constant 0.000000e+00 : f32
      %29 = vector.broadcast %cst_26 : f32 to vector<1x32xf32>
      %30 = arith.maximumf %28, %29 : vector<1x32xf32>
      %31 = math.sqrt %30 : vector<1x32xf32>
      %c0_27 = arith.constant 0 : index
      %c0_28 = arith.constant 0 : index
      %32 = vector.load %arg3[%c0_27, %c0_28] : memref<32x2xf32, #tpu.memory_space<vmem>>, vector<32x2xf32>
      %c0_29 = arith.constant 0 : index
      %c0_30 = arith.constant 0 : index
      %33 = vector.load %arg4[%c0_29, %c0_30] : memref<1x2xf32, #tpu.memory_space<vmem>>, vector<1x2xf32>
      %c0_31 = arith.constant 0 : index
      %c0_32 = arith.constant 0 : index
      %34 = vector.load %arg5[%c0_31, %c0_32] : memref<2x32xf32, #tpu.memory_space<vmem>>, vector<2x32xf32>
      %c0_33 = arith.constant 0 : index
      %c0_34 = arith.constant 0 : index
      %35 = vector.load %arg6[%c0_33, %c0_34] : memref<1x32xf32, #tpu.memory_space<vmem>>, vector<1x32xf32>
      %cst_35 = arith.constant dense<0.000000e+00> : vector<1x2xf32>
      %36 = tpu.matmul %24, %32, %cst_35 {dimension_numbers = #tpu.dot_dimension_numbers<[1], [0], [0], [1], [0, 0, 1, 1], [], []>} : vector<1x32xf32>, vector<32x2xf32>, vector<1x2xf32> -> vector<1x2xf32>
      %37 = arith.addf %36, %33 : vector<1x2xf32>
      %cst_36 = arith.constant 0.000000e+00 : f32
      %38 = vector.broadcast %cst_36 : f32 to vector<1x2xf32>
      %39 = arith.maximumf %37, %38 : vector<1x2xf32>
      %cst_37 = arith.constant dense<0.000000e+00> : vector<1x32xf32>
      %40 = tpu.matmul %39, %34, %cst_37 {dimension_numbers = #tpu.dot_dimension_numbers<[1], [0], [0], [1], [0, 0, 1, 1], [], []>} : vector<1x2xf32>, vector<2x32xf32>, vector<1x32xf32> -> vector<1x32xf32>
      %41 = arith.addf %40, %35 : vector<1x32xf32>
      %42 = arith.negf %41 : vector<1x32xf32>
      %43 = math.exp %42 : vector<1x32xf32>
      %cst_38 = arith.constant 1.000000e+00 : f32
      %44 = vector.broadcast %cst_38 : f32 to vector<1x32xf32>
      %45 = arith.addf %44, %43 : vector<1x32xf32>
      %46 = arith.divf %44, %45 : vector<1x32xf32>
      %c0_39 = arith.constant 0 : index
      %c0_40 = arith.constant 0 : index
      %47 = vector.load %arg7[%c0_39, %c0_40] : memref<32x2xf32, #tpu.memory_space<vmem>>, vector<32x2xf32>
      %c0_41 = arith.constant 0 : index
      %c0_42 = arith.constant 0 : index
      %48 = vector.load %arg8[%c0_41, %c0_42] : memref<1x2xf32, #tpu.memory_space<vmem>>, vector<1x2xf32>
      %c0_43 = arith.constant 0 : index
      %c0_44 = arith.constant 0 : index
      %49 = vector.load %arg9[%c0_43, %c0_44] : memref<2x32xf32, #tpu.memory_space<vmem>>, vector<2x32xf32>
      %c0_45 = arith.constant 0 : index
      %c0_46 = arith.constant 0 : index
      %50 = vector.load %arg10[%c0_45, %c0_46] : memref<1x32xf32, #tpu.memory_space<vmem>>, vector<1x32xf32>
      %cst_47 = arith.constant dense<0.000000e+00> : vector<1x2xf32>
      %51 = tpu.matmul %31, %47, %cst_47 {dimension_numbers = #tpu.dot_dimension_numbers<[1], [0], [0], [1], [0, 0, 1, 1], [], []>} : vector<1x32xf32>, vector<32x2xf32>, vector<1x2xf32> -> vector<1x2xf32>
      %52 = arith.addf %51, %48 : vector<1x2xf32>
      %cst_48 = arith.constant 0.000000e+00 : f32
      %53 = vector.broadcast %cst_48 : f32 to vector<1x2xf32>
      %54 = arith.maximumf %52, %53 : vector<1x2xf32>
      %cst_49 = arith.constant dense<0.000000e+00> : vector<1x32xf32>
      %55 = tpu.matmul %54, %49, %cst_49 {dimension_numbers = #tpu.dot_dimension_numbers<[1], [0], [0], [1], [0, 0, 1, 1], [], []>} : vector<1x2xf32>, vector<2x32xf32>, vector<1x32xf32> -> vector<1x32xf32>
      %56 = arith.addf %55, %50 : vector<1x32xf32>
      %57 = arith.negf %56 : vector<1x32xf32>
      %58 = math.exp %57 : vector<1x32xf32>
      %cst_50 = arith.constant 1.000000e+00 : f32
      %59 = vector.broadcast %cst_50 : f32 to vector<1x32xf32>
      %60 = arith.addf %59, %58 : vector<1x32xf32>
      %61 = arith.divf %59, %60 : vector<1x32xf32>
      %62 = arith.addf %46, %61 : vector<1x32xf32>
      %cst_51 = arith.constant 5.000000e-01 : f32
      %63 = vector.broadcast %cst_51 : f32 to vector<1x32xf32>
      %64 = arith.mulf %63, %62 : vector<1x32xf32>
      %65 = vector.shape_cast %64 : vector<1x32xf32> to vector<1x1x32xf32>
      %c0_52 = arith.constant 0 : index
      %c0_53 = arith.constant 0 : index
      %c0_54 = arith.constant 0 : index
      %66 = vector.load %arg11[%c0_52, %c0_53, %c0_54] : memref<1x1x32xf32, #tpu.memory_space<vmem>>, vector<1x1x32xf32>
      tpu.vector_store %arg11[%c0_52, %c0_53, %c0_54], %65 {strides = array<i32>} : memref<1x1x32xf32, #tpu.memory_space<vmem>>, vector<1x1x32xf32>,
    } else {
    }
    return
  }
  func.func @transform_0(%arg0: i32, %arg1: i32) -> (i32, i32, i32) {
    %c0_i32 = arith.constant 0 : i32
    %c0_i32_0 = arith.constant 0 : i32
    return %arg0, %c0_i32, %arg1 : i32, i32, i32
  }
  func.func @transform_1(%arg0: i32, %arg1: i32) -> (i32, i32) {
    %c0_i32 = arith.constant 0 : i32
    %c0_i32_0 = arith.constant 0 : i32
    %c0_i32_1 = arith.constant 0 : i32
    return %c0_i32, %c0_i32_0 : i32, i32
  }
  func.func @transform_2(%arg0: i32, %arg1: i32) -> (i32, i32) {
    %c0_i32 = arith.constant 0 : i32
    %c0_i32_0 = arith.constant 0 : i32
    %c0_i32_1 = arith.constant 0 : i32
    return %c0_i32, %c0_i32_0 : i32, i32
  }
  func.func @transform_3(%arg0: i32, %arg1: i32) -> (i32, i32) {
    %c0_i32 = arith.constant 0 : i32
    %c0_i32_0 = arith.constant 0 : i32
    %c0_i32_1 = arith.constant 0 : i32
    return %c0_i32, %c0_i32_0 : i32, i32
  }
  func.func @transform_4(%arg0: i32, %arg1: i32) -> (i32, i32) {
    %c0_i32 = arith.constant 0 : i32
    %c0_i32_0 = arith.constant 0 : i32
    %c0_i32_1 = arith.constant 0 : i32
    return %c0_i32, %c0_i32_0 : i32, i32
  }
  func.func @transform_5(%arg0: i32, %arg1: i32) -> (i32, i32) {
    %c0_i32 = arith.constant 0 : i32
    %c0_i32_0 = arith.constant 0 : i32
    %c0_i32_1 = arith.constant 0 : i32
    return %c0_i32, %c0_i32_0 : i32, i32
  }
  func.func @transform_6(%arg0: i32, %arg1: i32) -> (i32, i32) {
    %c0_i32 = arith.constant 0 : i32
    %c0_i32_0 = arith.constant 0 : i32
    %c0_i32_1 = arith.constant 0 : i32
    return %c0_i32, %c0_i32_0 : i32, i32
  }
  func.func @transform_7(%arg0: i32, %arg1: i32) -> (i32, i32) {
    %c0_i32 = arith.constant 0 : i32
    %c0_i32_0 = arith.constant 0 : i32
    %c0_i32_1 = arith.constant 0 : i32
    return %c0_i32, %c0_i32_0 : i32, i32
  }
  func.func @transform_8(%arg0: i32, %arg1: i32) -> (i32, i32) {
    %c0_i32 = arith.constant 0 : i32
    %c0_i32_0 = arith.constant 0 : i32
    %c0_i32_1 = arith.constant 0 : i32
    return %c0_i32, %c0_i32_0 : i32, i32
  }
  func.func @transform_9(%arg0: i32, %arg1: i32) -> (i32, i32, i32) {
    %c0_i32 = arith.constant 0 : i32
    %c0_i32_0 = arith.constant 0 : i32
    %c0_i32_1 = arith.constant 0 : i32
    return %arg0, %c0_i32, %c0_i32_0 : i32, i32, i32
  }
}

</mosaic_0001>

<llo_original>
// kernel: tpu_custom_call.1
$region0: #{tpu_custom_call.1}
  #allocation0 [shape = 'u32[]', space=smem, size = 0x4, offset = 0x4, fixed_abs, tag = 'smem constant byte address 0x4 - core index']
  #allocation1 [shape = 'u32[144,128]{1,0:T(1,128)}', space=vmem, size = 0x12000, scoped, tag = 'internal scratch']
  #allocation2 [shape = 'f32[1,32,128]{2,1,0:T(8,128)}', space=vmem, size = 0x4000, scoped, tag = 'scratch operand']
  #allocation3 [shape = 'f32[1,32,128]{2,1,0:T(8,128)}', space=vmem, size = 0x4000, scoped, tag = 'scratch operand']
  %s0 = inlined_call_operand.hbm [shape: f32[2,32,256], index: 0, kind: input, shape index: {}]
  %s1 = inlined_call_operand.vmem [shape: f32[32,2], index: 1, kind: input, shape index: {}]
  %s2 = inlined_call_operand.vmem [shape: f32[1,2], index: 2, kind: input, shape index: {}]
  %s3 = inlined_call_operand.vmem [shape: f32[2,32], index: 3, kind: input, shape index: {}]
  %s4 = inlined_call_operand.vmem [shape: f32[1,32], index: 4, kind: input, shape index: {}]
  %s5 = inlined_call_operand.vmem [shape: f32[32,2], index: 5, kind: input, shape index: {}]
  %s6 = inlined_call_operand.vmem [shape: f32[1,2], index: 6, kind: input, shape index: {}]
  %s7 = inlined_call_operand.vmem [shape: f32[2,32], index: 7, kind: input, shape index: {}]
  %s8 = inlined_call_operand.vmem [shape: f32[1,32], index: 8, kind: input, shape index: {}]
  %s9 = inlined_call_operand.hbm [shape: f32[2,1,32], index: 9, kind: output, shape index: {}]
  %s10 = sld [smem:[#allocation0]]
  $region81: #{tpu_custom_call.1} parent=0
    _
  %s12 = ssub.s32 1, %s10
  %s13 = scalar_select 0, %s12, %s10
  $region1: #{tpu_custom_call.1} parent=0
    #allocation4 [shape = 'u8[65536]{0}', space=vmem, size = 0x10000, scoped, tag = 'input window, operand 0']
    #allocation5 [shape = 's32[2]{0}', space=sflag, size = 0x8, scoped, tag = 'scoped memory for tpu_custom_call.1']
    #allocation6 [shape = 's32[2]{0}', space=sflag, size = 0x8, scoped, tag = 'scoped memory for tpu_custom_call.1']
    #allocation7 [shape = 'u8[1024]{0}', space=vmem, size = 0x400, scoped, tag = 'output window, operand 0']
    %14 = vsyncpa [#allocation5], 0
    %s15 = scalar_lea.sflag [#allocation5], 1
    %16 = vsyncpa %s15, 0
    %17 = vsyncpa [#allocation6], 0
    %s18 = scalar_lea.sflag [#allocation6], 1
    %19 = vsyncpa %s18, 0
    loop: start=0, step=1, limit=4
    $region2: #{tpu_custom_call.1} parent=1 // loop_pre_header
      _
    $region3: #{tpu_custom_call.1} parent=1 // loop_header
      %s21 = sphi 0, %s25
      %p22 = scmp.ge.s32.totalorder %s21, 4
      %s28 = sphi 0, %s40
      %s29 = sphi 0, %s36
      %s30 = sphi 0, %s28
      %s31 = sphi 0, %s29
      %s32 = sphi 0, %s30
      %s33 = sphi 0, %s31
      %s45 = sphi 0, %s47
      %s48 = sphi 0, %s45
      %s49 = sphi 0, %s48
      %s65 = sphi 0, %s49
      %s69 = sphi 0, %s69
      %s71 = sphi 0, %s69
      %s72 = sphi 0, %s71
      %s86 = sphi 0, %s72
      %s90 = sphi 0, %s90
      %s92 = sphi 0, %s90
      %s93 = sphi 0, %s92
      %s107 = sphi 0, %s93
      %s111 = sphi 0, %s111
      %s113 = sphi 0, %s111
      %s114 = sphi 0, %s113
      %s128 = sphi 0, %s114
      %s132 = sphi 0, %s132
      %s134 = sphi 0, %s132
      %s135 = sphi 0, %s134
      %s149 = sphi 0, %s135
      %s153 = sphi 0, %s153
      %s155 = sphi 0, %s153
      %s156 = sphi 0, %s155
      %s170 = sphi 0, %s156
      %s174 = sphi 0, %s174
      %s176 = sphi 0, %s174
      %s177 = sphi 0, %s176
      %s191 = sphi 0, %s177
      %s195 = sphi 0, %s195
      %s197 = sphi 0, %s195
      %s198 = sphi 0, %s197
      %s212 = sphi 0, %s198
      %s216 = sphi 0, %s216
      %s218 = sphi 0, %s216
      %s219 = sphi 0, %s218
      %s233 = sphi 0, %s219
      %s239 = sphi 0, %s241
      %s242 = sphi 0, %s239
      %s243 = sphi 0, %s242
      %s259 = sphi 0, %s243
    $region4: #{tpu_custom_call.1} parent=1 // loop_header_branch
      %24 = sbr.rel (%p22) target = $region8
    $region5: #{tpu_custom_call.1} parent=1 // loop_body
      %s26 = ssub.s32 %s21, 1
      %s27 = ssub.s32 %s21, 2
      %s34 = sadd.s32 1, %s29
      %p35 = scmp.ge.s32.totalorder %s34, 1
      %s36 = scalar_select %p35, 0, %s34
      %s37 = sadd.s32 1, %s28
      %s38 = scalar_select %p35, %s37, %s28
      %p39 = scmp.ge.s32.totalorder %s38, 2
      %s40 = scalar_select %p39, 0, %s38
      %s41 = ssub.s32 %s28, %s40
      %s42 = ssub.s32 %s29, %s36
      %s43 = sor.u32 %s41, %s42
      %p44 = scmp.eq.s32.totalorder %s43, 0
      %s46 = sadd.s32 %s45, 1
      %s47 = scalar_select %p44, %s45, %s46
      %p50 = pneg %p44
      %p51 = scmp.eq.s32.totalorder %s21, 1
      %p52 = por %p50, %p51
      %p53 = scmp.ne.s32.totalorder %s45, %s48
      %p54 = scmp.eq.s32.totalorder %s21, 0
      %p55 = por %p53, %p54
      %p56 = scmp.ne.s32.totalorder %s45, %s48
      %p57 = scmp.eq.s32.totalorder %s26, 1
      %p58 = por %p56, %p57
      %p59 = scmp.ne.s32.totalorder %s48, %s49
      %p60 = scmp.eq.s32.totalorder %s26, 0
      %p61 = por %p59, %p60
      %p62 = scmp.ne.s32.totalorder %s48, %s49
      %p63 = scmp.eq.s32.totalorder %s27, 1
      %p64 = por %p62, %p63
      %p66 = scmp.ne.s32.totalorder %s49, %s65
      %p67 = scmp.eq.s32.totalorder %s27, 0
      %p68 = por %p66, %p67
      %s70 = sadd.s32 %s69, 1
      %p73 = scmp.eq.s32.totalorder %s21, 1
      %p74 = scmp.ne.s32.totalorder %s69, %s71
      %p75 = scmp.eq.s32.totalorder %s21, 0
      %p76 = por %p74, %p75
      %p77 = scmp.ne.s32.totalorder %s69, %s71
      %p78 = scmp.eq.s32.totalorder %s26, 1
      %p79 = por %p77, %p78
      %p80 = scmp.ne.s32.totalorder %s71, %s72
      %p81 = scmp.eq.s32.totalorder %s26, 0
      %p82 = por %p80, %p81
      %p83 = scmp.ne.s32.totalorder %s71, %s72
      %p84 = scmp.eq.s32.totalorder %s27, 1
      %p85 = por %p83, %p84
      %p87 = scmp.ne.s32.totalorder %s72, %s86
      %p88 = scmp.eq.s32.totalorder %s27, 0
      %p89 = por %p87, %p88
      %s91 = sadd.s32 %s90, 1
      %p94 = scmp.eq.s32.totalorder %s21, 1
      %p95 = scmp.ne.s32.totalorder %s90, %s92
      %p96 = scmp.eq.s32.totalorder %s21, 0
      %p97 = por %p95, %p96
      %p98 = scmp.ne.s32.totalorder %s90, %s92
      %p99 = scmp.eq.s32.totalorder %s26, 1
      %p100 = por %p98, %p99
      %p101 = scmp.ne.s32.totalorder %s92, %s93
      %p102 = scmp.eq.s32.totalorder %s26, 0
      %p103 = por %p101, %p102
      %p104 = scmp.ne.s32.totalorder %s92, %s93
      %p105 = scmp.eq.s32.totalorder %s27, 1
      %p106 = por %p104, %p105
      %p108 = scmp.ne.s32.totalorder %s93, %s107
      %p109 = scmp.eq.s32.totalorder %s27, 0
      %p110 = por %p108, %p109
      %s112 = sadd.s32 %s111, 1
      %p115 = scmp.eq.s32.totalorder %s21, 1
      %p116 = scmp.ne.s32.totalorder %s111, %s113
      %p117 = scmp.eq.s32.totalorder %s21, 0
      %p118 = por %p116, %p117
      %p119 = scmp.ne.s32.totalorder %s111, %s113
      %p120 = scmp.eq.s32.totalorder %s26, 1
      %p121 = por %p119, %p120
      %p122 = scmp.ne.s32.totalorder %s113, %s114
      %p123 = scmp.eq.s32.totalorder %s26, 0
      %p124 = por %p122, %p123
      %p125 = scmp.ne.s32.totalorder %s113, %s114
      %p126 = scmp.eq.s32.totalorder %s27, 1
      %p127 = por %p125, %p126
      %p129 = scmp.ne.s32.totalorder %s114, %s128
      %p130 = scmp.eq.s32.totalorder %s27, 0
      %p131 = por %p129, %p130
      %s133 = sadd.s32 %s132, 1
      %p136 = scmp.eq.s32.totalorder %s21, 1
      %p137 = scmp.ne.s32.totalorder %s132, %s134
      %p138 = scmp.eq.s32.totalorder %s21, 0
      %p139 = por %p137, %p138
      %p140 = scmp.ne.s32.totalorder %s132, %s134
      %p141 = scmp.eq.s32.totalorder %s26, 1
      %p142 = por %p140, %p141
      %p143 = scmp.ne.s32.totalorder %s134, %s135
      %p144 = scmp.eq.s32.totalorder %s26, 0
      %p145 = por %p143, %p144
      %p146 = scmp.ne.s32.totalorder %s134, %s135
      %p147 = scmp.eq.s32.totalorder %s27, 1
      %p148 = por %p146, %p147
      %p150 = scmp.ne.s32.totalorder %s135, %s149
      %p151 = scmp.eq.s32.totalorder %s27, 0
      %p152 = por %p150, %p151
      %s154 = sadd.s32 %s153, 1
      %p157 = scmp.eq.s32.totalorder %s21, 1
      %p158 = scmp.ne.s32.totalorder %s153, %s155
      %p159 = scmp.eq.s32.totalorder %s21, 0
      %p160 = por %p158, %p159
      %p161 = scmp.ne.s32.totalorder %s153, %s155
      %p162 = scmp.eq.s32.totalorder %s26, 1
      %p163 = por %p161, %p162
      %p164 = scmp.ne.s32.totalorder %s155, %s156
      %p165 = scmp.eq.s32.totalorder %s26, 0
      %p166 = por %p164, %p165
      %p167 = scmp.ne.s32.totalorder %s155, %s156
      %p168 = scmp.eq.s32.totalorder %s27, 1
      %p169 = por %p167, %p168
      %p171 = scmp.ne.s32.totalorder %s156, %s170
      %p172 = scmp.eq.s32.totalorder %s27, 0
      %p173 = por %p171, %p172
      %s175 = sadd.s32 %s174, 1
      %p178 = scmp.eq.s32.totalorder %s21, 1
      %p179 = scmp.ne.s32.totalorder %s174, %s176
      %p180 = scmp.eq.s32.totalorder %s21, 0
      %p181 = por %p179, %p180
      %p182 = scmp.ne.s32.totalorder %s174, %s176
      %p183 = scmp.eq.s32.totalorder %s26, 1
      %p184 = por %p182, %p183
      %p185 = scmp.ne.s32.totalorder %s176, %s177
      %p186 = scmp.eq.s32.totalorder %s26, 0
      %p187 = por %p185, %p186
      %p188 = scmp.ne.s32.totalorder %s176, %s177
      %p189 = scmp.eq.s32.totalorder %s27, 1
      %p190 = por %p188, %p189
      %p192 = scmp.ne.s32.totalorder %s177, %s191
      %p193 = scmp.eq.s32.totalorder %s27, 0
      %p194 = por %p192, %p193
      %s196 = sadd.s32 %s195, 1
      %p199 = scmp.eq.s32.totalorder %s21, 1
      %p200 = scmp.ne.s32.totalorder %s195, %s197
      %p201 = scmp.eq.s32.totalorder %s21, 0
      %p202 = por %p200, %p201
      %p203 = scmp.ne.s32.totalorder %s195, %s197
      %p204 = scmp.eq.s32.totalorder %s26, 1
      %p205 = por %p203, %p204
      %p206 = scmp.ne.s32.totalorder %s197, %s198
      %p207 = scmp.eq.s32.totalorder %s26, 0
      %p208 = por %p206, %p207
      %p209 = scmp.ne.s32.totalorder %s197, %s198
      %p210 = scmp.eq.s32.totalorder %s27, 1
      %p211 = por %p209, %p210
      %p213 = scmp.ne.s32.totalorder %s198, %s212
      %p214 = scmp.eq.s32.totalorder %s27, 0
      %p215 = por %p213, %p214
      %s217 = sadd.s32 %s216, 1
      %p220 = scmp.eq.s32.totalorder %s21, 1
      %p221 = scmp.ne.s32.totalorder %s216, %s218
      %p222 = scmp.eq.s32.totalorder %s21, 0
      %p223 = por %p221, %p222
      %p224 = scmp.ne.s32.totalorder %s216, %s218
      %p225 = scmp.eq.s32.totalorder %s26, 1
      %p226 = por %p224, %p225
      %p227 = scmp.ne.s32.totalorder %s218, %s219
      %p228 = scmp.eq.s32.totalorder %s26, 0
      %p229 = por %p227, %p228
      %p230 = scmp.ne.s32.totalorder %s218, %s219
      %p231 = scmp.eq.s32.totalorder %s27, 1
      %p232 = por %p230, %p231
      %p234 = scmp.ne.s32.totalorder %s219, %s233
      %p235 = scmp.eq.s32.totalorder %s27, 0
      %p236 = por %p234, %p235
      %s237 = ssub.s32 %s28, %s40
      %p238 = scmp.eq.s32.totalorder %s237, 0
      %s240 = sadd.s32 %s239, 1
      %s241 = scalar_select %p238, %s239, %s240
      %p244 = pneg %p238
      %p245 = scmp.eq.s32.totalorder %s21, 1
      %p246 = por %p244, %p245
      %p247 = scmp.ne.s32.totalorder %s239, %s242
      %p248 = scmp.eq.s32.totalorder %s21, 0
      %p249 = por %p247, %p248
      %p250 = scmp.ne.s32.totalorder %s239, %s242
      %p251 = scmp.eq.s32.totalorder %s26, 1
      %p252 = por %p250, %p251
      %p253 = scmp.ne.s32.totalorder %s242, %s243
      %p254 = scmp.eq.s32.totalorder %s26, 0
      %p255 = por %p253, %p254
      %p256 = scmp.ne.s32.totalorder %s242, %s243
      %p257 = scmp.eq.s32.totalorder %s27, 1
      %p258 = por %p256, %p257
      %p260 = scmp.ne.s32.totalorder %s243, %s259
      %p261 = scmp.eq.s32.totalorder %s27, 0
      %p262 = por %p260, %p261
      %p263 = scmp.le.s32.totalorder 1, %s21
      %p264 = scmp.lt.s32.totalorder %s21, 3
      %p265 = pnand %p263, %p264
      %p266 = pneg %p265
      // Predicated region
      $region9: #{tpu_custom_call.1} parent=5 // pred_check
        _
      $region10: #{tpu_custom_call.1} parent=5 // pred_check_branch
        %268 = sbr.rel (%p265) target = $region12
      $region11: #{tpu_custom_call.1} parent=5 // pred_region
        %s269 = ssub.s32 %s21, 1
        // Predicated region
        $region13: #{tpu_custom_call.1} parent=11 // pred_check
          %p270 = pneg %p82
        $region14: #{tpu_custom_call.1} parent=11 // pred_check_branch
          %272 = sbr.rel (%p270) target = $region16
        $region15: #{tpu_custom_call.1} parent=11 // pred_region
          _
        $region16: #{tpu_custom_call.1} parent=11 // pred_fallthru
          _
        // Predicated region
        $region17: #{tpu_custom_call.1} parent=11 // pred_check
          %p273 = pneg %p103
        $region18: #{tpu_custom_call.1} parent=11 // pred_check_branch
          %275 = sbr.rel (%p273) target = $region20
        $region19: #{tpu_custom_call.1} parent=11 // pred_region
          _
        $region20: #{tpu_custom_call.1} parent=11 // pred_fallthru
          _
        // Predicated region
        $region21: #{tpu_custom_call.1} parent=11 // pred_check
          %p276 = pneg %p124
        $region22: #{tpu_custom_call.1} parent=11 // pred_check_branch
          %278 = sbr.rel (%p276) target = $region24
        $region23: #{tpu_custom_call.1} parent=11 // pred_region
          _
        $region24: #{tpu_custom_call.1} parent=11 // pred_fallthru
          _
        // Predicated region
        $region25: #{tpu_custom_call.1} parent=11 // pred_check
          %p279 = pneg %p145
        $region26: #{tpu_custom_call.1} parent=11 // pred_check_branch
          %281 = sbr.rel (%p279) target = $region28
        $region27: #{tpu_custom_call.1} parent=11 // pred_region
          _
        $region28: #{tpu_custom_call.1} parent=11 // pred_fallthru
          _
        // Predicated region
        $region29: #{tpu_custom_call.1} parent=11 // pred_check
          %p282 = pneg %p166
        $region30: #{tpu_custom_call.1} parent=11 // pred_check_branch
          %284 = sbr.rel (%p282) target = $region32
        $region31: #{tpu_custom_call.1} parent=11 // pred_region
          _
        $region32: #{tpu_custom_call.1} parent=11 // pred_fallthru
          _
        // Predicated region
        $region33: #{tpu_custom_call.1} parent=11 // pred_check
          %p285 = pneg %p187
        $region34: #{tpu_custom_call.1} parent=11 // pred_check_branch
          %287 = sbr.rel (%p285) target = $region36
        $region35: #{tpu_custom_call.1} parent=11 // pred_region
          _
        $region36: #{tpu_custom_call.1} parent=11 // pred_fallthru
          _
        // Predicated region
        $region37: #{tpu_custom_call.1} parent=11 // pred_check
          %p288 = pneg %p208
        $region38: #{tpu_custom_call.1} parent=11 // pred_check_branch
          %290 = sbr.rel (%p288) target = $region40
        $region39: #{tpu_custom_call.1} parent=11 // pred_region
          _
        $region40: #{tpu_custom_call.1} parent=11 // pred_fallthru
          _
        // Predicated region
        $region41: #{tpu_custom_call.1} parent=11 // pred_check
          %p291 = pneg %p229
        $region42: #{tpu_custom_call.1} parent=11 // pred_check_branch
          %293 = sbr.rel (%p291) target = $region44
        $region43: #{tpu_custom_call.1} parent=11 // pred_region
          _
        $region44: #{tpu_custom_call.1} parent=11 // pred_fallthru
          _
      $region12: #{tpu_custom_call.1} parent=5 // pred_fallthru
        _
      %p294 = scmp.lt.s32.totalorder %s21, 2
      // Predicated region
      $region45: #{tpu_custom_call.1} parent=5 // pred_check
        %p295 = pneg %p294
      $region46: #{tpu_custom_call.1} parent=5 // pred_check_branch
        %297 = sbr.rel (%p295) target = $region48
      $region47: #{tpu_custom_call.1} parent=5 // pred_region
        // Predicated region
        $region49: #{tpu_custom_call.1} parent=47 // pred_check
          %p298 = pneg %p55
        $region50: #{tpu_custom_call.1} parent=47 // pred_check_branch
          %300 = sbr.rel (%p298) target = $region52
        $region51: #{tpu_custom_call.1} parent=47 // pred_region
          %s301 = sand.u32 %s45, 1
          %s302 = scalar_lea.sflag [#allocation5], %s301
          %s303 = sand.u32 %s45, 1
          %s304 = smul.addr %s303, 64
          %s305 = scalar_lea.vmem [#allocation4], %s304
          %s306 = smul.u32 2, %s29
          %s308 = ssub.s32 1024, 1024
          %309 = vsyncadd %s302, %s308
          %s310 = smul.addr %s28, 8
          %s311 = sadd.s32 %s306, %s310
          %s312 = smul.addr %s311, 128
          %s313 = scalar_lea.hbm %s0, %s312
          %s314 = sshll.u32 %s305, 4
          %s315 = int_to_ptr.vmem [resolvable:$true] %s314
          %320 = dma.hbm_to_vmem [thread:$0]  %s313, 1024, %s315, %s302, 256, 256, 16
        $region52: #{tpu_custom_call.1} parent=47 // pred_fallthru
          _
      $region48: #{tpu_custom_call.1} parent=5 // pred_fallthru
        _
      %p321 = scmp.le.s32.totalorder 1, %s21
      %p322 = scmp.lt.s32.totalorder %s21, 3
      %p323 = pnand %p321, %p322
      %p324 = pneg %p323
      // Predicated region
      $region53: #{tpu_custom_call.1} parent=5 // pred_check
        _
      $region54: #{tpu_custom_call.1} parent=5 // pred_check_branch
        %326 = sbr.rel (%p323) target = $region56
      $region55: #{tpu_custom_call.1} parent=5 // pred_region
        %s327 = ssub.s32 %s21, 1
        %s328 = sand.u32 %s48, 1
        %s329 = scalar_lea.sflag [#allocation5], %s328
        %s330 = sand.u32 %s48, 1
        %s331 = smul.addr %s330, 64
        %s332 = scalar_lea.vmem [#allocation4], %s331
        // Predicated region
        $region57: #{tpu_custom_call.1} parent=55 // pred_check
          %p333 = pneg %p61
        $region58: #{tpu_custom_call.1} parent=55 // pred_check_branch
          %335 = sbr.rel (%p333) target = $region60
        $region59: #{tpu_custom_call.1} parent=55 // pred_region
          %336 = dma.done %s329, 1024
        $region60: #{tpu_custom_call.1} parent=55 // pred_fallthru
          _
        %s337 = sand.u32 %s48, 1
        %s338 = scalar_lea.sflag [#allocation5], %s337
        %s339 = sand.u32 %s48, 1
        %s340 = smul.addr %s339, 64
        %s341 = scalar_lea.vmem [#allocation4], %s340
        %p342 = pneg %p61
        %p343 = pneg %p58
        %p344 = pneg %p82
        %p345 = pneg %p79
        %p346 = pneg %p103
        %p347 = pneg %p100
        %p348 = pneg %p124
        %p349 = pneg %p121
        %p350 = pneg %p145
        %p351 = pneg %p142
        %p352 = pneg %p166
        %p353 = pneg %p163
        %p354 = pneg %p187
        %p355 = pneg %p184
        %p356 = pneg %p208
        %p357 = pneg %p205
        %p358 = pneg %p229
        %p359 = pneg %p226
        %p360 = pneg %p255
        %p361 = pneg %p252
        %s362 = sand.u32 %s242, 1
        %s363 = scalar_lea.sflag [#allocation6], %s362
        %s364 = sand.u32 %s242, 1
        %s365 = scalar_lea.vmem [#allocation7], %s364
        %s366 = smul.u32 2, %s31
        %p367 = scmp.eq.s32.totalorder %s31, 0
        // Predicated region
        $region61: #{tpu_custom_call.1} parent=55 // pred_check
          %p368 = pneg %p367
        $region62: #{tpu_custom_call.1} parent=55 // pred_check_branch
          %370 = sbr.rel (%p368) target = $region64
        $region63: #{tpu_custom_call.1} parent=55 // pred_region
          %371 = vst [vmem:[#allocation2] sm:$0xff] 0.0
          %372 = vst [vmem:[#allocation2 + $0x8] sm:$0xff] 0.0
          %373 = vst [vmem:[#allocation2 + $0x10] sm:$0xff] 0.0
          %374 = vst [vmem:[#allocation2 + $0x18] sm:$0xff] 0.0
          %375 = vst [vmem:[#allocation3] sm:$0xff] 0.0
          %376 = vst [vmem:[#allocation3 + $0x8] sm:$0xff] 0.0
          %377 = vst [vmem:[#allocation3 + $0x10] sm:$0xff] 0.0
          %378 = vst [vmem:[#allocation3 + $0x18] sm:$0xff] 0.0
        $region64: #{tpu_custom_call.1} parent=55 // pred_fallthru
          _
        %v379 = vld [vmem:[%s332] sm:$0xff]
        %v380 = vld [vmem:[%s332 + $0x8] sm:$0xff]
        %v381 = vld [vmem:[%s332 + $0x10] sm:$0xff]
        %v382 = vld [vmem:[%s332 + $0x18] sm:$0xff]
        %v383 = vld [vmem:[%s332 + $0x20] sm:$0xff]
        %v384 = vld [vmem:[%s332 + $0x28] sm:$0xff]
        %v385 = vld [vmem:[%s332 + $0x30] sm:$0xff]
        %v386 = vld [vmem:[%s332 + $0x38] sm:$0xff]
        %v387 = vmul.f32 %v379, %v379
        %v388 = vmul.f32 %v381, %v381
        %v389 = vmul.f32 %v383, %v383
        %v390 = vmul.f32 %v385, %v385
        %v391 = vadd.f32 %v379, %v380
        %v392 = vadd.f32 %v381, %v382
        %v393 = vadd.f32 %v383, %v384
        %v394 = vadd.f32 %v385, %v386
        %v395 = vmul.f32 %v380, %v380
        %v396 = vmul.f32 %v382, %v382
        %v397 = vmul.f32 %v384, %v384
        %v398 = vmul.f32 %v386, %v386
        %v399 = vadd.f32 %v387, %v395
        %v400 = vadd.f32 %v388, %v396
        %v401 = vadd.f32 %v389, %v397
        %v402 = vadd.f32 %v390, %v398
        %v403 = vld [vmem:[#allocation2] sm:$0xff]
        %v404 = vld [vmem:[#allocation2 + $0x8] sm:$0xff]
        %v405 = vld [vmem:[#allocation2 + $0x10] sm:$0xff]
        %v406 = vld [vmem:[#allocation2 + $0x18] sm:$0xff]
        %v407 = vadd.f32 %v403, %v391
        %v408 = vadd.f32 %v404, %v392
        %v409 = vadd.f32 %v405, %v393
        %v410 = vadd.f32 %v406, %v394
        %411 = vst [vmem:[#allocation2] sm:$0xff] %v407
        %412 = vst [vmem:[#allocation2 + $0x8] sm:$0xff] %v408
        %413 = vst [vmem:[#allocation2 + $0x10] sm:$0xff] %v409
        %414 = vst [vmem:[#allocation2 + $0x18] sm:$0xff] %v410
        %v415 = vld [vmem:[#allocation3] sm:$0xff]
        %v416 = vld [vmem:[#allocation3 + $0x8] sm:$0xff]
        %v417 = vld [vmem:[#allocation3 + $0x10] sm:$0xff]
        %v418 = vld [vmem:[#allocation3 + $0x18] sm:$0xff]
        %v419 = vadd.f32 %v415, %v399
        %v420 = vadd.f32 %v416, %v400
        %v421 = vadd.f32 %v417, %v401
        %v422 = vadd.f32 %v418, %v402
        %423 = vst [vmem:[#allocation3] sm:$0xff] %v419
        %424 = vst [vmem:[#allocation3 + $0x8] sm:$0xff] %v420
        %425 = vst [vmem:[#allocation3 + $0x10] sm:$0xff] %v421
        %426 = vst [vmem:[#allocation3 + $0x18] sm:$0xff] %v422
        // Predicated region
        $region65: #{tpu_custom_call.1} parent=55 // pred_check
          %p427 = pneg %p367
        $region66: #{tpu_custom_call.1} parent=55 // pred_check_branch
          %429 = sbr.rel (%p427) target = $region68
        $region67: #{tpu_custom_call.1} parent=55 // pred_region
          %v430 = vld [vmem:[#allocation2] sm:$0xff]
          %v431 = vld [vmem:[#allocation2 + $0x8] sm:$0xff]
          %v432 = vld [vmem:[#allocation2 + $0x10] sm:$0xff]
          %v433 = vld [vmem:[#allocation2 + $0x18] sm:$0xff]
          %434 = vadd.xlane.f32.xlu0 %v430
          %v435 = vpop.xlane.xlu0 %434
          %436 = vadd.xlane.f32.xlu0 %v431
          %v437 = vpop.xlane.xlu0 %436
          %438 = vadd.xlane.f32.xlu0 %v432
          %v439 = vpop.xlane.xlu0 %438
          %440 = vadd.xlane.f32.xlu0 %v433
          %v441 = vpop.xlane.xlu0 %440
          %v442 = vld [vmem:[#allocation3] sm:$0xff]
          %v443 = vld [vmem:[#allocation3 + $0x8] sm:$0xff]
          %v444 = vld [vmem:[#allocation3 + $0x10] sm:$0xff]
          %v445 = vld [vmem:[#allocation3 + $0x18] sm:$0xff]
          %446 = vadd.xlane.f32.xlu0 %v442
          %v447 = vpop.xlane.xlu0 %446
          %448 = vadd.xlane.f32.xlu0 %v443
          %v449 = vpop.xlane.xlu0 %448
          %450 = vadd.xlane.f32.xlu0 %v444
          %v451 = vpop.xlane.xlu0 %450
          %452 = vadd.xlane.f32.xlu0 %v445
          %v453 = vpop.xlane.xlu0 %452
          %v454 = vmul.f32 %v435, 0.00390625
          %v455 = vmul.f32 %v437, 0.00390625
          %v456 = vmul.f32 %v439, 0.00390625
          %v457 = vmul.f32 %v441, 0.00390625
          %v458 = vmul.f32 %v454, %v435
          %v459 = vmul.f32 %v455, %v437
          %v460 = vmul.f32 %v456, %v439
          %v461 = vmul.f32 %v457, %v441
          %v462 = vsub.f32 %v447, %v458
          %v463 = vsub.f32 %v449, %v459
          %v464 = vsub.f32 %v451, %v460
          %v465 = vsub.f32 %v453, %v461
          %v466 = vmul.f32 %v462, 0.003921569
          %v467 = vmul.f32 %v463, 0.003921569
          %v468 = vmul.f32 %v464, 0.003921569
          %v469 = vmul.f32 %v465, 0.003921569
          %v470 = vmax.f32 %v466, 0.0
          %v471 = vmax.f32 %v467, 0.0
          %v472 = vmax.f32 %v468, 0.0
          %v473 = vmax.f32 %v469, 0.0
          %v474 = vrsqrt.pop %v470
          %v475 = vmul.f32 %v470, %v474
          %vm476 = vcmp.eq.f32.partialorder %v470, inf
          %v477 = vsel %vm476, %v470, %v475
          %vm478 = vcmp.eq.f32.partialorder %v470, 0.0
          %v479 = vand.u32 %v470, 2147483648
          %v480 = vsel %vm478, %v479, %v477
          %v481 = vrsqrt.pop %v471
          %v482 = vmul.f32 %v471, %v481
          %vm483 = vcmp.eq.f32.partialorder %v471, inf
          %v484 = vsel %vm483, %v471, %v482
          %vm485 = vcmp.eq.f32.partialorder %v471, 0.0
          %v486 = vand.u32 %v471, 2147483648
          %v487 = vsel %vm485, %v486, %v484
          %v488 = vrsqrt.pop %v472
          %v489 = vmul.f32 %v472, %v488
          %vm490 = vcmp.eq.f32.partialorder %v472, inf
          %v491 = vsel %vm490, %v472, %v489
          %vm492 = vcmp.eq.f32.partialorder %v472, 0.0
          %v493 = vand.u32 %v472, 2147483648
          %v494 = vsel %vm492, %v493, %v491
          %v495 = vrsqrt.pop %v473
          %v496 = vmul.f32 %v473, %v495
          %vm497 = vcmp.eq.f32.partialorder %v473, inf
          %v498 = vsel %vm497, %v473, %v496
          %vm499 = vcmp.eq.f32.partialorder %v473, 0.0
          %v500 = vand.u32 %v473, 2147483648
          %v501 = vsel %vm499, %v500, %v498
          %v502 = vld [vmem:[%s1] sm:$0xff]
          %v503 = vld [vmem:[%s1 + $0x8] sm:$0xff]
          %v504 = vld [vmem:[%s1 + $0x10] sm:$0xff]
          %v505 = vld [vmem:[%s1 + $0x18] sm:$0xff]
          %v506 = vld [vmem:[%s2] sm:$0x1]
          %v507 = vld [vmem:[%s3] sm:$0x3]
          %v508 = vld [vmem:[%s4] sm:$0x1]
          %v513 = vlaneseq
          %v514 = vand.u32 %v513, 127
          %v515 = vlaneseq
          %v516 = vshrl.u32 %v515, 7
          %v517 = vsub.s32 %v514, %v516
          %v518 = vrot.slane %v454, %v517
          %v519 = vadd.s32 %v514, 4294967288
          %v520 = vlaneseq
          %v521 = vshrl.u32 %v520, 7
          %v522 = vsub.s32 %v519, %v521
          %v523 = vrot.slane %v455, %v522
          %vm524 = vcmask 130112
          %v525 = vsel %vm524, %v523, %v518
          %v526 = vadd.s32 %v514, 4294967280
          %v527 = vlaneseq
          %v528 = vshrl.u32 %v527, 7
          %v529 = vsub.s32 %v526, %v528
          %v530 = vrot.slane %v456, %v529
          %vm531 = vcmask 195712
          %v532 = vsel %vm531, %v530, %v525
          %v533 = vadd.s32 %v514, 4294967272
          %v534 = vlaneseq
          %v535 = vshrl.u32 %v534, 7
          %v536 = vsub.s32 %v533, %v535
          %v537 = vrot.slane %v457, %v536
          %vm538 = vcmask 261312
          %v539 = vsel %vm538, %v537, %v532
          %vm540 = vcmask 261120
          %v541 = vsel %vm540, %v539, 0
          %543 = vmatprep.subr.mxu0 0.0
          %544 = vmatpush1.msra.mxu0 %v502
          %545 = vmatprep.subr.mxu0 0.0
          %546 = vmatpush1.msra.mxu0 %v503
          %547 = vmatprep.subr.mxu0 0.0
          %548 = vmatpush1.msra.mxu0 %v504
          %549 = vmatprep.subr.mxu0 0.0
          %550 = vmatpush1.msra.mxu0 %v505
          %551 = vmatprep.subr.mxu0 0.0
          %552 = vmatpush1.msra.mxu0 0.0
          %553 = vmatprep.subr.mxu0 0.0
          %554 = vmatpush1.msra.mxu0 0.0
          %555 = vmatprep.subr.mxu0 0.0
          %556 = vmatpush1.msra.mxu0 0.0
          %557 = vmatprep.subr.mxu0 0.0
          %558 = vmatpush1.msra.mxu0 0.0
          %559 = vmatprep.subr.mxu0 0.0
          %560 = vmatpush1.msra.mxu0 0.0
          %561 = vmatprep.subr.mxu0 0.0
          %562 = vmatpush1.msra.mxu0 0.0
          %563 = vmatprep.subr.mxu0 0.0
          %564 = vmatpush1.msra.mxu0 0.0
          %565 = vmatprep.subr.mxu0 0.0
          %566 = vmatpush1.msra.mxu0 0.0
          %567 = vmatprep.subr.mxu0 0.0
          %568 = vmatpush1.msra.mxu0 0.0
          %569 = vmatprep.subr.mxu0 0.0
          %570 = vmatpush1.msra.mxu0 0.0
          %571 = vmatprep.subr.mxu0 0.0
          %572 = vmatpush1.msra.mxu0 0.0
          %573 = vmatprep.subr.mxu0 0.0
          %574 = vmatpush1.msra.mxu0 0.0
          %575 = vmatprep.subr.mxu0 0.0
          %576 = vmatpush1.msra.mxu0 0.0
          %577 = vmatprep.subr.mxu0 0.0
          %578 = vmatpush1.msra.mxu0 0.0
          %579 = vmatprep.subr.mxu0 0.0
          %580 = vmatpush1.msra.mxu0 0.0
          %581 = vmatprep.subr.mxu0 0.0
          %582 = vmatpush1.msra.mxu0 0.0
          %583 = vmatprep.subr.mxu0 0.0
          %584 = vmatpush1.msra.mxu0 0.0
          %585 = vmatprep.subr.mxu0 0.0
          %586 = vmatpush1.msra.mxu0 0.0
          %587 = vmatprep.subr.mxu0 0.0
          %588 = vmatpush1.msra.mxu0 0.0
          %589 = vmatprep.subr.mxu0 0.0
          %590 = vmatpush1.msra.mxu0 0.0
          %591 = vmatprep.subr.mxu0 0.0
          %592 = vmatpush1.msra.mxu0 0.0
          %593 = vmatprep.subr.mxu0 0.0
          %594 = vmatpush1.msra.mxu0 0.0
          %595 = vmatprep.subr.mxu0 0.0
          %596 = vmatpush1.msra.mxu0 0.0
          %597 = vmatprep.subr.mxu0 0.0
          %598 = vmatpush1.msra.mxu0 0.0
          %599 = vmatprep.subr.mxu0 0.0
          %600 = vmatpush1.msra.mxu0 0.0
          %601 = vmatprep.subr.mxu0 0.0
          %602 = vmatpush1.msra.mxu0 0.0
          %603 = vmatprep.subr.mxu0 0.0
          %604 = vmatpush1.msra.mxu0 0.0
          %605 = vmatprep.subr.mxu0 0.0
          %606 = vmatpush1.msra.mxu0 0.0
          %607 = vmatprep.mubr.f32.mxu0 0.0
          %608 = vmatmul.mubr.f32.gmra.mrb[0].mxu0 %v541
          %v609 = vpop.f32.mrb[0].mxu0
          %v610 = vadd.f32 %v506, %v609
          %v611 = vpop.f32.mrb[0].mxu0
          %612 = vdwg.mxu0
          %v613 = vmax.f32 %v610, 0.0
          %vm614 = vcmask 15360
          %v616 = vsel %vm614, %v613, 0
          %vm618 = vcmask 1041408
          %v620 = vsel %vm618, %v507, 0
          %622 = vmatprep.subr.mxu0 0.0
          %623 = vmatpush1.msra.mxu0 %v620
          %624 = vmatprep.subr.mxu0 0.0
          %625 = vmatpush1.msra.mxu0 0.0
          %626 = vmatprep.subr.mxu0 0.0
          %627 = vmatpush1.msra.mxu0 0.0
          %628 = vmatprep.subr.mxu0 0.0
          %629 = vmatpush1.msra.mxu0 0.0
          %630 = vmatprep.subr.mxu0 0.0
          %631 = vmatpush1.msra.mxu0 0.0
          %632 = vmatprep.subr.mxu0 0.0
          %633 = vmatpush1.msra.mxu0 0.0
          %634 = vmatprep.subr.mxu0 0.0
          %635 = vmatpush1.msra.mxu0 0.0
          %636 = vmatprep.subr.mxu0 0.0
          %637 = vmatpush1.msra.mxu0 0.0
          %638 = vmatprep.subr.mxu0 0.0
          %639 = vmatpush1.msra.mxu0 0.0
          %640 = vmatprep.subr.mxu0 0.0
          %641 = vmatpush1.msra.mxu0 0.0
          %642 = vmatprep.subr.mxu0 0.0
          %643 = vmatpush1.msra.mxu0 0.0
          %644 = vmatprep.subr.mxu0 0.0
          %645 = vmatpush1.msra.mxu0 0.0
          %646 = vmatprep.subr.mxu0 0.0
          %647 = vmatpush1.msra.mxu0 0.0
          %648 = vmatprep.subr.mxu0 0.0
          %649 = vmatpush1.msra.mxu0 0.0
          %650 = vmatprep.subr.mxu0 0.0
          %651 = vmatpush1.msra.mxu0 0.0
          %652 = vmatprep.subr.mxu0 0.0
          %653 = vmatpush1.msra.mxu0 0.0
          %654 = vmatprep.subr.mxu0 0.0
          %655 = vmatpush1.msra.mxu0 0.0
          %656 = vmatprep.subr.mxu0 0.0
          %657 = vmatpush1.msra.mxu0 0.0
          %658 = vmatprep.subr.mxu0 0.0
          %659 = vmatpush1.msra.mxu0 0.0
          %660 = vmatprep.subr.mxu0 0.0
          %661 = vmatpush1.msra.mxu0 0.0
          %662 = vmatprep.subr.mxu0 0.0
          %663 = vmatpush1.msra.mxu0 0.0
          %664 = vmatprep.subr.mxu0 0.0
          %665 = vmatpush1.msra.mxu0 0.0
          %666 = vmatprep.subr.mxu0 0.0
          %667 = vmatpush1.msra.mxu0 0.0
          %668 = vmatprep.subr.mxu0 0.0
          %669 = vmatpush1.msra.mxu0 0.0
          %670 = vmatprep.subr.mxu0 0.0
          %671 = vmatpush1.msra.mxu0 0.0
          %672 = vmatprep.subr.mxu0 0.0
          %673 = vmatpush1.msra.mxu0 0.0
          %674 = vmatprep.subr.mxu0 0.0
          %675 = vmatpush1.msra.mxu0 0.0
          %676 = vmatprep.subr.mxu0 0.0
          %677 = vmatpush1.msra.mxu0 0.0
          %678 = vmatprep.subr.mxu0 0.0
          %679 = vmatpush1.msra.mxu0 0.0
          %680 = vmatprep.subr.mxu0 0.0
          %681 = vmatpush1.msra.mxu0 0.0
          %682 = vmatprep.subr.mxu0 0.0
          %683 = vmatpush1.msra.mxu0 0.0
          %684 = vmatprep.subr.mxu0 0.0
          %685 = vmatpush1.msra.mxu0 0.0
          %686 = vmatprep.mubr.f32.mxu0 0.0
          %687 = vmatmul.mubr.f32.gmra.mrb[0].mxu0 %v616
          %v688 = vpop.f32.mrb[0].mxu0
          %v689 = vadd.f32 %v508, %v688
          %v690 = vpop.f32.mrb[0].mxu0
          %691 = vdwg.mxu0
          %v692 = vxor.u32 %v689, 2147483648
          %v693 = vmul.f32 %v692, 1.442695
          %v694 = vpow.pop %v693
          %v695 = vadd.f32 %v694, 1.0
          %v696 = vrcp.pop %v695
          %v697 = vmul.f32 1.0, %v696
          %v698 = vld [vmem:[%s5] sm:$0xff]
          %v699 = vld [vmem:[%s5 + $0x8] sm:$0xff]
          %v700 = vld [vmem:[%s5 + $0x10] sm:$0xff]
          %v701 = vld [vmem:[%s5 + $0x18] sm:$0xff]
          %v702 = vld [vmem:[%s6] sm:$0x1]
          %v703 = vld [vmem:[%s7] sm:$0x3]
          %v704 = vld [vmem:[%s8] sm:$0x1]
          %v709 = vlaneseq
          %v710 = vshrl.u32 %v709, 7
          %v711 = vsub.s32 %v514, %v710
          %v712 = vrot.slane %v480, %v711
          %v713 = vlaneseq
          %v714 = vshrl.u32 %v713, 7
          %v715 = vsub.s32 %v519, %v714
          %v716 = vrot.slane %v487, %v715
          %v717 = vsel %vm524, %v716, %v712
          %v718 = vlaneseq
          %v719 = vshrl.u32 %v718, 7
          %v720 = vsub.s32 %v526, %v719
          %v721 = vrot.slane %v494, %v720
          %v722 = vsel %vm531, %v721, %v717
          %v723 = vlaneseq
          %v724 = vshrl.u32 %v723, 7
          %v725 = vsub.s32 %v533, %v724
          %v726 = vrot.slane %v501, %v725
          %v727 = vsel %vm538, %v726, %v722
          %v728 = vsel %vm540, %v727, 0
          %730 = vmatprep.subr.mxu0 0.0
          %731 = vmatpush1.msra.mxu0 %v698
          %732 = vmatprep.subr.mxu0 0.0
          %733 = vmatpush1.msra.mxu0 %v699
          %734 = vmatprep.subr.mxu0 0.0
          %735 = vmatpush1.msra.mxu0 %v700
          %736 = vmatprep.subr.mxu0 0.0
          %737 = vmatpush1.msra.mxu0 %v701
          %738 = vmatprep.subr.mxu0 0.0
          %739 = vmatpush1.msra.mxu0 0.0
          %740 = vmatprep.subr.mxu0 0.0
          %741 = vmatpush1.msra.mxu0 0.0
          %742 = vmatprep.subr.mxu0 0.0
          %743 = vmatpush1.msra.mxu0 0.0
          %744 = vmatprep.subr.mxu0 0.0
          %745 = vmatpush1.msra.mxu0 0.0
          %746 = vmatprep.subr.mxu0 0.0
          %747 = vmatpush1.msra.mxu0 0.0
          %748 = vmatprep.subr.mxu0 0.0
          %749 = vmatpush1.msra.mxu0 0.0
          %750 = vmatprep.subr.mxu0 0.0
          %751 = vmatpush1.msra.mxu0 0.0
          %752 = vmatprep.subr.mxu0 0.0
          %753 = vmatpush1.msra.mxu0 0.0
          %754 = vmatprep.subr.mxu0 0.0
          %755 = vmatpush1.msra.mxu0 0.0
          %756 = vmatprep.subr.mxu0 0.0
          %757 = vmatpush1.msra.mxu0 0.0
          %758 = vmatprep.subr.mxu0 0.0
          %759 = vmatpush1.msra.mxu0 0.0
          %760 = vmatprep.subr.mxu0 0.0
          %761 = vmatpush1.msra.mxu0 0.0
          %762 = vmatprep.subr.mxu0 0.0
          %763 = vmatpush1.msra.mxu0 0.0
          %764 = vmatprep.subr.mxu0 0.0
          %765 = vmatpush1.msra.mxu0 0.0
          %766 = vmatprep.subr.mxu0 0.0
          %767 = vmatpush1.msra.mxu0 0.0
          %768 = vmatprep.subr.mxu0 0.0
          %769 = vmatpush1.msra.mxu0 0.0
          %770 = vmatprep.subr.mxu0 0.0
          %771 = vmatpush1.msra.mxu0 0.0
          %772 = vmatprep.subr.mxu0 0.0
          %773 = vmatpush1.msra.mxu0 0.0
          %774 = vmatprep.subr.mxu0 0.0
          %775 = vmatpush1.msra.mxu0 0.0
          %776 = vmatprep.subr.mxu0 0.0
          %777 = vmatpush1.msra.mxu0 0.0
          %778 = vmatprep.subr.mxu0 0.0
          %779 = vmatpush1.msra.mxu0 0.0
          %780 = vmatprep.subr.mxu0 0.0
          %781 = vmatpush1.msra.mxu0 0.0
          %782 = vmatprep.subr.mxu0 0.0
          %783 = vmatpush1.msra.mxu0 0.0
          %784 = vmatprep.subr.mxu0 0.0
          %785 = vmatpush1.msra.mxu0 0.0
          %786 = vmatprep.subr.mxu0 0.0
          %787 = vmatpush1.msra.mxu0 0.0
          %788 = vmatprep.subr.mxu0 0.0
          %789 = vmatpush1.msra.mxu0 0.0
          %790 = vmatprep.subr.mxu0 0.0
          %791 = vmatpush1.msra.mxu0 0.0
          %792 = vmatprep.subr.mxu0 0.0
          %793 = vmatpush1.msra.mxu0 0.0
          %794 = vmatprep.mubr.f32.mxu0 0.0
          %795 = vmatmul.mubr.f32.gmra.mrb[0].mxu0 %v728
          %v796 = vpop.f32.mrb[0].mxu0
          %v797 = vadd.f32 %v702, %v796
          %v798 = vpop.f32.mrb[0].mxu0
          %799 = vdwg.mxu0
          %v800 = vmax.f32 %v797, 0.0
          %v802 = vsel %vm614, %v800, 0
          %v805 = vsel %vm618, %v703, 0
          %807 = vmatprep.subr.mxu0 0.0
          %808 = vmatpush1.msra.mxu0 %v805
          %809 = vmatprep.subr.mxu0 0.0
          %810 = vmatpush1.msra.mxu0 0.0
          %811 = vmatprep.subr.mxu0 0.0
          %812 = vmatpush1.msra.mxu0 0.0
          %813 = vmatprep.subr.mxu0 0.0
          %814 = vmatpush1.msra.mxu0 0.0
          %815 = vmatprep.subr.mxu0 0.0
          %816 = vmatpush1.msra.mxu0 0.0
          %817 = vmatprep.subr.mxu0 0.0
          %818 = vmatpush1.msra.mxu0 0.0
          %819 = vmatprep.subr.mxu0 0.0
          %820 = vmatpush1.msra.mxu0 0.0
          %821 = vmatprep.subr.mxu0 0.0
          %822 = vmatpush1.msra.mxu0 0.0
          %823 = vmatprep.subr.mxu0 0.0
          %824 = vmatpush1.msra.mxu0 0.0
          %825 = vmatprep.subr.mxu0 0.0
          %826 = vmatpush1.msra.mxu0 0.0
          %827 = vmatprep.subr.mxu0 0.0
          %828 = vmatpush1.msra.mxu0 0.0
          %829 = vmatprep.subr.mxu0 0.0
          %830 = vmatpush1.msra.mxu0 0.0
          %831 = vmatprep.subr.mxu0 0.0
          %832 = vmatpush1.msra.mxu0 0.0
          %833 = vmatprep.subr.mxu0 0.0
          %834 = vmatpush1.msra.mxu0 0.0
          %835 = vmatprep.subr.mxu0 0.0
          %836 = vmatpush1.msra.mxu0 0.0
          %837 = vmatprep.subr.mxu0 0.0
          %838 = vmatpush1.msra.mxu0 0.0
          %839 = vmatprep.subr.mxu0 0.0
          %840 = vmatpush1.msra.mxu0 0.0
          %841 = vmatprep.subr.mxu0 0.0
          %842 = vmatpush1.msra.mxu0 0.0
          %843 = vmatprep.subr.mxu0 0.0
          %844 = vmatpush1.msra.mxu0 0.0
          %845 = vmatprep.subr.mxu0 0.0
          %846 = vmatpush1.msra.mxu0 0.0
          %847 = vmatprep.subr.mxu0 0.0
          %848 = vmatpush1.msra.mxu0 0.0
          %849 = vmatprep.subr.mxu0 0.0
          %850 = vmatpush1.msra.mxu0 0.0
          %851 = vmatprep.subr.mxu0 0.0
          %852 = vmatpush1.msra.mxu0 0.0
          %853 = vmatprep.subr.mxu0 0.0
          %854 = vmatpush1.msra.mxu0 0.0
          %855 = vmatprep.subr.mxu0 0.0
          %856 = vmatpush1.msra.mxu0 0.0
          %857 = vmatprep.subr.mxu0 0.0
          %858 = vmatpush1.msra.mxu0 0.0
          %859 = vmatprep.subr.mxu0 0.0
          %860 = vmatpush1.msra.mxu0 0.0
          %861 = vmatprep.subr.mxu0 0.0
          %862 = vmatpush1.msra.mxu0 0.0
          %863 = vmatprep.subr.mxu0 0.0
          %864 = vmatpush1.msra.mxu0 0.0
          %865 = vmatprep.subr.mxu0 0.0
          %866 = vmatpush1.msra.mxu0 0.0
          %867 = vmatprep.subr.mxu0 0.0
          %868 = vmatpush1.msra.mxu0 0.0
          %869 = vmatprep.subr.mxu0 0.0
          %870 = vmatpush1.msra.mxu0 0.0
          %871 = vmatprep.mubr.f32.mxu0 0.0
          %872 = vmatmul.mubr.f32.gmra.mrb[0].mxu0 %v802
          %v873 = vpop.f32.mrb[0].mxu0
          %v874 = vadd.f32 %v704, %v873
          %v875 = vpop.f32.mrb[0].mxu0
          %876 = vdwg.mxu0
          %v877 = vxor.u32 %v874, 2147483648
          %v878 = vmul.f32 %v877, 1.442695
          %v879 = vpow.pop %v878
          %v880 = vadd.f32 %v879, 1.0
          %v881 = vrcp.pop %v880
          %v882 = vmul.f32 1.0, %v881
          %v883 = vadd.f32 %v697, %v882
          %v884 = vmul.f32 %v883, 0.5
          %vm885 = vcmask 253952
          %886 = vst.msk [vmem:[%s365] sm:$0x1] %vm885, %v884
        $region68: #{tpu_custom_call.1} parent=55 // pred_fallthru
          _
        %s887 = sand.u32 %s242, 1
        %s888 = scalar_lea.sflag [#allocation6], %s887
        %s889 = sand.u32 %s242, 1
        %s890 = scalar_lea.vmem [#allocation7], %s889
        // Predicated region
        $region69: #{tpu_custom_call.1} parent=55 // pred_check
          %p891 = pneg %p252
        $region70: #{tpu_custom_call.1} parent=55 // pred_check_branch
          %893 = sbr.rel (%p891) target = $region72
        $region71: #{tpu_custom_call.1} parent=55 // pred_region
          %s895 = ssub.s32 16, 16
          %896 = vsyncadd %s888, %s895
          %s897 = smul.addr %s30, 16
          %s898 = scalar_lea.hbm %s9, %s897
          %s900 = sshll.u32 %s890, 4
          %s901 = int_to_ptr.vmem [resolvable:$true] %s900
          %903 = dma.vmem_to_hbm [thread:$0]  %s901, 16, %s898, %s888
        $region72: #{tpu_custom_call.1} parent=55 // pred_fallthru
          _
      $region56: #{tpu_custom_call.1} parent=5 // pred_fallthru
        _
      %p904 = scmp.le.s32.totalorder 2, %s21
      // Predicated region
      $region73: #{tpu_custom_call.1} parent=5 // pred_check
        %p905 = pneg %p904
      $region74: #{tpu_custom_call.1} parent=5 // pred_check_branch
        %907 = sbr.rel (%p905) target = $region76
      $region75: #{tpu_custom_call.1} parent=5 // pred_region
        %s908 = ssub.s32 %s21, 2
        // Predicated region
        $region77: #{tpu_custom_call.1} parent=75 // pred_check
          %p909 = pneg %p258
        $region78: #{tpu_custom_call.1} parent=75 // pred_check_branch
          %911 = sbr.rel (%p909) target = $region80
        $region79: #{tpu_custom_call.1} parent=75 // pred_region
          %s912 = sand.u32 %s243, 1
          %s913 = scalar_lea.sflag [#allocation6], %s912
          %s914 = sand.u32 %s243, 1
          %s915 = scalar_lea.vmem [#allocation7], %s914
          %916 = dma.done %s913, 16
        $region80: #{tpu_custom_call.1} parent=75 // pred_fallthru
          _
      $region76: #{tpu_custom_call.1} parent=5 // pred_fallthru
        _
    $region6: #{tpu_custom_call.1} parent=1 // loop_footer
      %s25 = sadd.s32 1, %s21
    $region7: #{tpu_custom_call.1} parent=1 // loop_footer_branch
      %20 = sbr.rel target = $region3
    $region8: #{tpu_custom_call.1} parent=1 // loop_exit
      _
    %917 = vsyncpa [#allocation5], 1
    %s918 = scalar_lea.sflag [#allocation5], 1
    %919 = vsyncpa %s918, 1
    %920 = vsyncpa [#allocation6], 1
    %s921 = scalar_lea.sflag [#allocation6], 1
    %922 = vsyncpa %s921, 1

</llo_original>
